<compile_context>
chip_gen: v5e
topology: v5e:2x2
jax: 0.10.0
libtpu: 0.0.40
codegen_flags: <defaults>
</compile_context>

<pallas_src>
import functools
import math

import jax
import jax.numpy as jnp
from jax.experimental import pallas as pl
from jax.experimental.pallas import tpu as pltpu

EPS = 1e-5  # PyTorch nn.LayerNorm default


def _round_up(x, m):
    return ((x + m - 1) // m) * m


def _vmem_capacity_bytes():
    """Per-core VMEM capacity; conservative 64 MiB (v7x) if query fails."""
    try:
        info = pltpu.get_tpu_info()
        for name in ("vmem_capacity_bytes", "vmem_bytes"):
            cap = getattr(info, name, None)
            if cap:
                return int(cap)
    except Exception:
        pass
    return 64 * (1 << 20)


def prenorm_kernel(x_ref, p_ref, w_ref, o_ref, *, d_actual, use_bf16, sandwich):
    """One (tile_rows, d_pad) tile: center/scale -> Linear -> LayerNorm.

    p_ref rows: 0 = folded bias (beta1 @ W + bw), 1 = gamma2, 2 = beta2
    (rows 3..7 are padding).  gamma1/beta1 are pre-folded into W'/bias in the
    wrapper, so the first LayerNorm here is only center + rsqrt-scale.
    If d_pad > d_actual the extra lanes carry zeros and are masked out of the
    LayerNorm statistics, so the math matches the unpadded computation.
    """
    d_pad = x_ref.shape[-1]
    x = x_ref[...].astype(jnp.float32)

    bias_f = p_ref[0:1, :]
    g2 = p_ref[1:2, :]
    b2 = p_ref[2:3, :]

    inv_n = jnp.float32(1.0 / d_actual)

    if d_actual == d_pad:
        def center_scale(v):
            mean = jnp.mean(v, axis=-1, keepdims=True)
            xc = v - mean
            var = jnp.mean(xc * xc, axis=-1, keepdims=True)
            return xc * jax.lax.rsqrt(var + EPS)
    else:
        mask = (jax.lax.broadcasted_iota(jnp.int32, (1, d_pad), 1)
                < d_actual).astype(jnp.float32)

        def center_scale(v):
            vm = v * mask
            mean = jnp.sum(vm, axis=-1, keepdims=True) * inv_n
            xc = (v - mean) * mask
            var = jnp.sum(xc * xc, axis=-1, keepdims=True) * inv_n
            return xc * jax.lax.rsqrt(var + EPS)

    # 1) pre-norm (gamma1/beta1 already folded into W'/bias by the wrapper).
    h = center_scale(x)

    # 2) fn = Linear: h @ W' + bias', f32 accumulation on the MXU.
    #    W' is already stored in bf16 when use_bf16 (pre-cast in the wrapper).
    if use_bf16:
        h = h.astype(jnp.bfloat16)
    y = jnp.dot(h, w_ref[...], preferred_element_type=jnp.float32) + bias_f

    # 3) norm_out (sandwich=True) or Identity.
    if sandwich:
        out = center_scale(y) * g2 + b2
    else:
        out = y

    o_ref[...] = out.astype(o_ref.dtype)


@functools.partial(
    jax.jit,
    static_argnames=("tile_rows", "use_bf16", "sandwich", "single_buffer_consts"))
def _prenorm_impl(x, gamma1, beta1, w, bw, gamma2, beta2, *,
                  tile_rows, use_bf16, sandwich, single_buffer_consts):
    orig_shape = x.shape
    D = orig_shape[-1]
    rows = math.prod(orig_shape[:-1])

    # ---- feature dim: only pad to lane-dense when it actually pays off ------
    if D > 128 and D % 128 != 0:
        d_pad = _round_up(D, 128)
    else:
        d_pad = D                      # full-extent last dim is always legal

    # ---- generation-aware VMEM budget ---------------------------------------
    cap = _vmem_capacity_bytes()
    budget = int(cap * 0.70)           # ~44 MiB on v7x, ~90 MiB on v5e/v6e
    w_bytes = 2 if use_bf16 else 4
    n_const_buf = 1 if single_buffer_consts else 2

    def vmem_est(tr):
        io = 2 * 2 * tr * d_pad * 4                    # double-buffered x/out
        wgt = n_const_buf * d_pad * d_pad * w_bytes    # resident weight block
        par = n_const_buf * 8 * d_pad * 4              # packed param block
        tmp = 3 * tr * d_pad * 4                       # h, y, masked temps
        return io + wgt + par + tmp

    # ---- row tile: big, MXU-aligned, >=2 grid steps, VMEM-budgeted ----------
    t = min(int(tile_rows), _round_up(rows, 8))
    while rows >= 16 and pl.cdiv(rows, t) < 2 and t > 8:
        t = max(8, t // 2)             # give both v7x TensorCores work
    while t > 128 and vmem_est(t) > budget:
        t //= 2
    if t >= 256:
        t = (t // 256) * 256           # full-height MXU passes on v6e/v7x
    elif t >= 128:
        t = (t // 128) * 128
    else:
        t = _round_up(t, 8)            # sublane alignment for tiny inputs

    vmem_limit = int(min(cap - (8 << 20), max(2 * vmem_est(t), 32 << 20)))

    # ---- fold gamma1/beta1 into the linear layer; prep constant blocks ------
    # (one O(D^2) prep; callers can hoist the bf16 cast out of the jit too)
    w_f = gamma1[:, None] * w                      # W' = diag(gamma1) @ W
    bias_f = beta1 @ w + bw                        # b' = beta1 @ W + bw

    params = jnp.stack([bias_f, gamma2, beta2], axis=0)       # (3, D)
    params = jnp.pad(params, ((0, 5), (0, d_pad - D)))        # (8, d_pad)

    w_p = jnp.pad(w_f, ((0, d_pad - D), (0, d_pad - D)))
    if use_bf16:
        w_p = w_p.astype(jnp.bfloat16)             # cast once, not per step

    x2d = x.reshape(rows, D)
    if d_pad != D:
        x2d = jnp.pad(x2d, ((0, 0), (0, d_pad - D)))

    # ---- pallas call ---------------------------------------------------------
    row_spec = pl.BlockSpec((t, d_pad), lambda i: (i, 0))
    const_kwargs = {}
    if single_buffer_consts and hasattr(pl, "Buffered"):
        const_kwargs = dict(pipeline_mode=pl.Buffered(1))     # constant blocks
    param_spec = pl.BlockSpec((8, d_pad), lambda i: (0, 0), **const_kwargs)
    mat_spec = pl.BlockSpec((d_pad, d_pad), lambda i: (0, 0), **const_kwargs)

    kernel = functools.partial(prenorm_kernel, d_actual=D,
                               use_bf16=use_bf16, sandwich=sandwich)

    out2d = pl.pallas_call(
        kernel,
        out_shape=jax.ShapeDtypeStruct((rows, d_pad), x.dtype),
        grid_spec=pltpu.PrefetchScalarGridSpec(
            num_scalar_prefetch=0,
            grid=(pl.cdiv(rows, t),),          # no row padding; Pallas masks
            in_specs=[row_spec, param_spec, mat_spec],
            out_specs=row_spec,
        ),
        compiler_params=pltpu.CompilerParams(
            dimension_semantics=("parallel",),
            vmem_limit_bytes=vmem_limit,
        ),
    )(x2d, params, w_p)

    out = out2d if d_pad == D else out2d[:, :D]
    return out.reshape(orig_shape)


def prenorm_forward(x, gamma1, beta1, w, bw, gamma2, beta2, *,
                    tile_rows=512, use_bf16_matmul=None, sandwich=True):
    """x: (..., D) float32.  Returns the same shape.

    use_bf16_matmul=None -> auto: bf16 MXU operands for D >= 256 (v5e/v6e/v7x
    are bf16-native), f32 for small D so tight tolerances hold.
    """
    D = x.shape[-1]
    if use_bf16_matmul is None:
        use_bf16_matmul = D >= 256
    try:
        return _prenorm_impl(x, gamma1, beta1, w, bw, gamma2, beta2,
                             tile_rows=tile_rows, use_bf16=bool(use_bf16_matmul),
                             sandwich=sandwich, single_buffer_consts=True)
    except Exception:
        # pl.Buffered(1) not supported on this jax version -> double-buffer
        # the constant blocks instead (correctness identical).
        return _prenorm_impl(x, gamma1, beta1, w, bw, gamma2, beta2,
                             tile_rows=tile_rows, use_bf16=bool(use_bf16_matmul),
                             sandwich=sandwich, single_buffer_consts=False)


# TODO(synk): for very large D (weight no longer VMEM-resident, esp. on v7x's
# 64 MiB) add N/K grid axes with an f32 accumulator scratch + pl.when init.


def prenorm_reference(x, gamma1, beta1, w, bw, gamma2, beta2):
    """Pure-JAX reference matching the PyTorch module (sandwich=True)."""
    def ln(v, g, b):
        m = jnp.mean(v, axis=-1, keepdims=True)
        var = jnp.mean((v - m) ** 2, axis=-1, keepdims=True)
        return (v - m) / jnp.sqrt(var + EPS) * g + b
    h = ln(x, gamma1, beta1)
    y = h @ w + bw
    return ln(y, gamma2, beta2)


if __name__ == "__main__":
    B, S, D = 2, 8, 32  # batch=2, seq=8, hidden=32

    key = jax.random.PRNGKey(0)
    kx, kw, kb = jax.random.split(key, 3)

    x = jax.random.normal(kx, (B, S, D), dtype=jnp.float32)

    # LayerNorm params: PyTorch default init (gamma=1, beta=0).
    gamma1 = jnp.ones((D,), jnp.float32)
    beta1 = jnp.zeros((D,), jnp.float32)
    gamma2 = jnp.ones((D,), jnp.float32)
    beta2 = jnp.zeros((D,), jnp.float32)

    # fn = Linear(D, D): deterministic synthetic weights.
    w = jax.random.normal(kw, (D, D), dtype=jnp.float32) * (1.0 / jnp.sqrt(D))
    bw = jax.random.normal(kb, (D,), dtype=jnp.float32) * 0.01

    out = prenorm_forward(x, gamma1, beta1, w, bw, gamma2, beta2)
    out = jax.block_until_ready(out)

    ref = prenorm_reference(x, gamma1, beta1, w, bw, gamma2, beta2)
    assert out.shape == (B, S, D)
    assert jnp.allclose(out, ref, atol=1e-4, rtol=1e-4), "mismatch vs reference"

    print("KERNEL_OK")
</pallas_src>

<mosaic_0001>
module attributes {stable_mosaic.version = 11 : i64} {
  func.func @prenorm_kernel(%arg0: i32, %arg1: memref<8x32xf32, #tpu.memory_space<vmem>>, %arg2: memref<8x32xf32, #tpu.memory_space<vmem>>, %arg3: memref<32x32xf32, #tpu.memory_space<vmem>>, %arg4: memref<8x32xf32, #tpu.memory_space<vmem>>) attributes {dimension_semantics = [#tpu.dimension_semantics<parallel>], iteration_bounds = array<i64: 2>, scalar_prefetch = 0 : i64, scratch_operands = 0 : i64, tpu.core_type = #tpu.core_type<tc>, window_params = [{transform_indices = @transform_0, window_bounds = array<i64: 8, 32>}, {pipeline_mode = #tpu.pipeline_mode<synchronous>, transform_indices = @transform_1, window_bounds = array<i64: 8, 32>}, {pipeline_mode = #tpu.pipeline_mode<synchronous>, transform_indices = @transform_2, window_bounds = array<i64: 32, 32>}, {transform_indices = @transform_3, window_bounds = array<i64: 8, 32>}]} {
    %c0 = arith.constant 0 : index
    %c0_0 = arith.constant 0 : index
    %0 = vector.load %arg1[%c0, %c0_0] : memref<8x32xf32, #tpu.memory_space<vmem>>, vector<8x32xf32>
    %c0_1 = arith.constant 0 : index
    %c0_2 = arith.constant 0 : index
    %1 = vector.load %arg2[%c0_1, %c0_2] : memref<8x32xf32, #tpu.memory_space<vmem>>, vector<1x32xf32>
    %c1 = arith.constant 1 : index
    %c0_3 = arith.constant 0 : index
    %2 = vector.load %arg2[%c1, %c0_3] : memref<8x32xf32, #tpu.memory_space<vmem>>, vector<1x32xf32>
    %c2 = arith.constant 2 : index
    %c0_4 = arith.constant 0 : index
    %3 = vector.load %arg2[%c2, %c0_4] : memref<8x32xf32, #tpu.memory_space<vmem>>, vector<1x32xf32>
    %cst = arith.constant dense<0.000000e+00> : vector<8xf32>
    %4 = vector.multi_reduction <add>, %0, %cst [1] : vector<8x32xf32> to vector<8xf32>
    %5 = vector.shape_cast %4 : vector<8xf32> to vector<8x1xf32>
    %cst_5 = arith.constant 3.200000e+01 : f32
    %6 = vector.broadcast %cst_5 : f32 to vector<8x1xf32>
    %7 = arith.divf %5, %6 : vector<8x1xf32>
    %8 = vector.broadcast %7 : vector<8x1xf32> to vector<8x32xf32>
    %9 = arith.subf %0, %8 : vector<8x32xf32>
    %10 = arith.mulf %9, %9 : vector<8x32xf32>
    %cst_6 = arith.constant dense<0.000000e+00> : vector<8xf32>
    %11 = vector.multi_reduction <add>, %10, %cst_6 [1] : vector<8x32xf32> to vector<8xf32>
    %12 = vector.shape_cast %11 : vector<8xf32> to vector<8x1xf32>
    %cst_7 = arith.constant 3.200000e+01 : f32
    %13 = vector.broadcast %cst_7 : f32 to vector<8x1xf32>
    %14 = arith.divf %12, %13 : vector<8x1xf32>
    %cst_8 = arith.constant 9.99999974E-6 : f32
    %15 = vector.broadcast %cst_8 : f32 to vector<8x1xf32>
    %16 = arith.addf %14, %15 : vector<8x1xf32>
    %17 = math.rsqrt %16 : vector<8x1xf32>
    %18 = vector.broadcast %17 : vector<8x1xf32> to vector<8x32xf32>
    %19 = arith.mulf %9, %18 : vector<8x32xf32>
    %c0_9 = arith.constant 0 : index
    %c0_10 = arith.constant 0 : index
    %20 = vector.load %arg3[%c0_9, %c0_10] : memref<32x32xf32, #tpu.memory_space<vmem>>, vector<32x32xf32>
    %cst_11 = arith.constant dense<0.000000e+00> : vector<8x32xf32>
    %21 = tpu.matmul %19, %20, %cst_11 {dimension_numbers = #tpu.dot_dimension_numbers<[1], [0], [0], [1], [0, 0, 1, 1], [], []>} : vector<8x32xf32>, vector<32x32xf32>, vector<8x32xf32> -> vector<8x32xf32>
    %22 = vector.broadcast %1 : vector<1x32xf32> to vector<8x32xf32>
    %23 = arith.addf %21, %22 : vector<8x32xf32>
    %cst_12 = arith.constant dense<0.000000e+00> : vector<8xf32>
    %24 = vector.multi_reduction <add>, %23, %cst_12 [1] : vector<8x32xf32> to vector<8xf32>
    %25 = vector.shape_cast %24 : vector<8xf32> to vector<8x1xf32>
    %cst_13 = arith.constant 3.200000e+01 : f32
    %26 = vector.broadcast %cst_13 : f32 to vector<8x1xf32>
    %27 = arith.divf %25, %26 : vector<8x1xf32>
    %28 = vector.broadcast %27 : vector<8x1xf32> to vector<8x32xf32>
    %29 = arith.subf %23, %28 : vector<8x32xf32>
    %30 = arith.mulf %29, %29 : vector<8x32xf32>
    %cst_14 = arith.constant dense<0.000000e+00> : vector<8xf32>
    %31 = vector.multi_reduction <add>, %30, %cst_14 [1] : vector<8x32xf32> to vector<8xf32>
    %32 = vector.shape_cast %31 : vector<8xf32> to vector<8x1xf32>
    %cst_15 = arith.constant 3.200000e+01 : f32
    %33 = vector.broadcast %cst_15 : f32 to vector<8x1xf32>
    %34 = arith.divf %32, %33 : vector<8x1xf32>
    %cst_16 = arith.constant 9.99999974E-6 : f32
    %35 = vector.broadcast %cst_16 : f32 to vector<8x1xf32>
    %36 = arith.addf %34, %35 : vector<8x1xf32>
    %37 = math.rsqrt %36 : vector<8x1xf32>
    %38 = vector.broadcast %37 : vector<8x1xf32> to vector<8x32xf32>
    %39 = arith.mulf %29, %38 : vector<8x32xf32>
    %40 = vector.broadcast %2 : vector<1x32xf32> to vector<8x32xf32>
    %41 = arith.mulf %39, %40 : vector<8x32xf32>
    %42 = vector.broadcast %3 : vector<1x32xf32> to vector<8x32xf32>
    %43 = arith.addf %41, %42 : vector<8x32xf32>
    %c0_17 = arith.constant 0 : index
    %c0_18 = arith.constant 0 : index
    %44 = vector.load %arg4[%c0_17, %c0_18] : memref<8x32xf32, #tpu.memory_space<vmem>>, vector<8x32xf32>
    tpu.vector_store %arg4[%c0_17, %c0_18], %43 {strides = array<i32>} : memref<8x32xf32, #tpu.memory_space<vmem>>, vector<8x32xf32>,
    return
  }
  func.func @transform_0(%arg0: i32) -> (i32, i32) {
    %c0_i32 = arith.constant 0 : i32
    %c0_i32_0 = arith.constant 0 : i32
    return %arg0, %c0_i32 : i32, i32
  }
  func.func @transform_1(%arg0: i32) -> (i32, i32) {
    %c0_i32 = arith.constant 0 : i32
    %c0_i32_0 = arith.constant 0 : i32
    %c0_i32_1 = arith.constant 0 : i32
    return %c0_i32, %c0_i32_0 : i32, i32
  }
  func.func @transform_2(%arg0: i32) -> (i32, i32) {
    %c0_i32 = arith.constant 0 : i32
    %c0_i32_0 = arith.constant 0 : i32
    %c0_i32_1 = arith.constant 0 : i32
    return %c0_i32, %c0_i32_0 : i32, i32
  }
  func.func @transform_3(%arg0: i32) -> (i32, i32) {
    %c0_i32 = arith.constant 0 : i32
    %c0_i32_0 = arith.constant 0 : i32
    return %arg0, %c0_i32 : i32, i32
  }
}

module attributes {stable_mosaic.version = 11 : i64} {
  func.func @prenorm_kernel(%arg0: i32, %arg1: memref<8x32xf32, #tpu.memory_space<vmem>>, %arg2: memref<8x32xf32, #tpu.memory_space<vmem>>, %arg3: memref<32x32xf32, #tpu.memory_space<vmem>>, %arg4: memref<8x32xf32, #tpu.memory_space<vmem>>) attributes {dimension_semantics = [#tpu.dimension_semantics<parallel>], iteration_bounds = array<i64: 2>, scalar_prefetch = 0 : i64, scratch_operands = 0 : i64, tpu.core_type = #tpu.core_type<tc>, window_params = [{transform_indices = @transform_0, window_bounds = array<i64: 8, 32>}, {pipeline_mode = #tpu.pipeline_mode<synchronous>, transform_indices = @transform_1, window_bounds = array<i64: 8, 32>}, {pipeline_mode = #tpu.pipeline_mode<synchronous>, transform_indices = @transform_2, window_bounds = array<i64: 32, 32>}, {transform_indices = @transform_3, window_bounds = array<i64: 8, 32>}]} {
    %c0 = arith.constant 0 : index
    %c0_0 = arith.constant 0 : index
    %0 = vector.load %arg1[%c0, %c0_0] : memref<8x32xf32, #tpu.memory_space<vmem>>, vector<8x32xf32>
    %c0_1 = arith.constant 0 : index
    %c0_2 = arith.constant 0 : index
    %1 = vector.load %arg2[%c0_1, %c0_2] : memref<8x32xf32, #tpu.memory_space<vmem>>, vector<1x32xf32>
    %c1 = arith.constant 1 : index
    %c0_3 = arith.constant 0 : index
    %2 = vector.load %arg2[%c1, %c0_3] : memref<8x32xf32, #tpu.memory_space<vmem>>, vector<1x32xf32>
    %c2 = arith.constant 2 : index
    %c0_4 = arith.constant 0 : index
    %3 = vector.load %arg2[%c2, %c0_4] : memref<8x32xf32, #tpu.memory_space<vmem>>, vector<1x32xf32>
    %cst = arith.constant dense<0.000000e+00> : vector<8xf32>
    %4 = vector.multi_reduction <add>, %0, %cst [1] : vector<8x32xf32> to vector<8xf32>
    %5 = vector.shape_cast %4 : vector<8xf32> to vector<8x1xf32>
    %cst_5 = arith.constant 3.200000e+01 : f32
    %6 = vector.broadcast %cst_5 : f32 to vector<8x1xf32>
    %7 = arith.divf %5, %6 : vector<8x1xf32>
    %8 = vector.broadcast %7 : vector<8x1xf32> to vector<8x32xf32>
    %9 = arith.subf %0, %8 : vector<8x32xf32>
    %10 = arith.mulf %9, %9 : vector<8x32xf32>
    %cst_6 = arith.constant dense<0.000000e+00> : vector<8xf32>
    %11 = vector.multi_reduction <add>, %10, %cst_6 [1] : vector<8x32xf32> to vector<8xf32>
    %12 = vector.shape_cast %11 : vector<8xf32> to vector<8x1xf32>
    %cst_7 = arith.constant 3.200000e+01 : f32
    %13 = vector.broadcast %cst_7 : f32 to vector<8x1xf32>
    %14 = arith.divf %12, %13 : vector<8x1xf32>
    %cst_8 = arith.constant 9.99999974E-6 : f32
    %15 = vector.broadcast %cst_8 : f32 to vector<8x1xf32>
    %16 = arith.addf %14, %15 : vector<8x1xf32>
    %17 = math.rsqrt %16 : vector<8x1xf32>
    %18 = vector.broadcast %17 : vector<8x1xf32> to vector<8x32xf32>
    %19 = arith.mulf %9, %18 : vector<8x32xf32>
    %c0_9 = arith.constant 0 : index
    %c0_10 = arith.constant 0 : index
    %20 = vector.load %arg3[%c0_9, %c0_10] : memref<32x32xf32, #tpu.memory_space<vmem>>, vector<32x32xf32>
    %cst_11 = arith.constant dense<0.000000e+00> : vector<8x32xf32>
    %21 = tpu.matmul %19, %20, %cst_11 {dimension_numbers = #tpu.dot_dimension_numbers<[1], [0], [0], [1], [0, 0, 1, 1], [], []>} : vector<8x32xf32>, vector<32x32xf32>, vector<8x32xf32> -> vector<8x32xf32>
    %22 = vector.broadcast %1 : vector<1x32xf32> to vector<8x32xf32>
    %23 = arith.addf %21, %22 : vector<8x32xf32>
    %cst_12 = arith.constant dense<0.000000e+00> : vector<8xf32>
    %24 = vector.multi_reduction <add>, %23, %cst_12 [1] : vector<8x32xf32> to vector<8xf32>
    %25 = vector.shape_cast %24 : vector<8xf32> to vector<8x1xf32>
    %cst_13 = arith.constant 3.200000e+01 : f32
    %26 = vector.broadcast %cst_13 : f32 to vector<8x1xf32>
    %27 = arith.divf %25, %26 : vector<8x1xf32>
    %28 = vector.broadcast %27 : vector<8x1xf32> to vector<8x32xf32>
    %29 = arith.subf %23, %28 : vector<8x32xf32>
    %30 = arith.mulf %29, %29 : vector<8x32xf32>
    %cst_14 = arith.constant dense<0.000000e+00> : vector<8xf32>
    %31 = vector.multi_reduction <add>, %30, %cst_14 [1] : vector<8x32xf32> to vector<8xf32>
    %32 = vector.shape_cast %31 : vector<8xf32> to vector<8x1xf32>
    %cst_15 = arith.constant 3.200000e+01 : f32
    %33 = vector.broadcast %cst_15 : f32 to vector<8x1xf32>
    %34 = arith.divf %32, %33 : vector<8x1xf32>
    %cst_16 = arith.constant 9.99999974E-6 : f32
    %35 = vector.broadcast %cst_16 : f32 to vector<8x1xf32>
    %36 = arith.addf %34, %35 : vector<8x1xf32>
    %37 = math.rsqrt %36 : vector<8x1xf32>
    %38 = vector.broadcast %37 : vector<8x1xf32> to vector<8x32xf32>
    %39 = arith.mulf %29, %38 : vector<8x32xf32>
    %40 = vector.broadcast %2 : vector<1x32xf32> to vector<8x32xf32>
    %41 = arith.mulf %39, %40 : vector<8x32xf32>
    %42 = vector.broadcast %3 : vector<1x32xf32> to vector<8x32xf32>
    %43 = arith.addf %41, %42 : vector<8x32xf32>
    %c0_17 = arith.constant 0 : index
    %c0_18 = arith.constant 0 : index
    %44 = vector.load %arg4[%c0_17, %c0_18] : memref<8x32xf32, #tpu.memory_space<vmem>>, vector<8x32xf32>
    tpu.vector_store %arg4[%c0_17, %c0_18], %43 {strides = array<i32>} : memref<8x32xf32, #tpu.memory_space<vmem>>, vector<8x32xf32>,
    return
  }
  func.func @transform_0(%arg0: i32) -> (i32, i32) {
    %c0_i32 = arith.constant 0 : i32
    %c0_i32_0 = arith.constant 0 : i32
    return %arg0, %c0_i32 : i32, i32
  }
  func.func @transform_1(%arg0: i32) -> (i32, i32) {
    %c0_i32 = arith.constant 0 : i32
    %c0_i32_0 = arith.constant 0 : i32
    %c0_i32_1 = arith.constant 0 : i32
    return %c0_i32, %c0_i32_0 : i32, i32
  }
  func.func @transform_2(%arg0: i32) -> (i32, i32) {
    %c0_i32 = arith.constant 0 : i32
    %c0_i32_0 = arith.constant 0 : i32
    %c0_i32_1 = arith.constant 0 : i32
    return %c0_i32, %c0_i32_0 : i32, i32
  }
  func.func @transform_3(%arg0: i32) -> (i32, i32) {
    %c0_i32 = arith.constant 0 : i32
    %c0_i32_0 = arith.constant 0 : i32
    return %arg0, %c0_i32 : i32, i32
  }
}

</mosaic_0001>

<llo_original>
// kernel: _prenorm_impl.1
$region0: #{_prenorm_impl.1}
  #allocation0 [shape = 'u32[]', space=smem, size = 0x4, offset = 0x4, fixed_abs, tag = 'smem constant byte address 0x4 - core index']
  #allocation1 [shape = 'u32[72,128]{1,0:T(1,128)}', space=vmem, size = 0x9000, scoped, tag = 'internal scratch']
  %s0 = inlined_call_operand.vmem [shape: f32[16,32], index: 0, kind: input, shape index: {}]
  %s1 = inlined_call_operand.vmem [shape: f32[8,32], index: 1, kind: input, shape index: {}]
  %s2 = inlined_call_operand.vmem [shape: f32[32,32], index: 2, kind: input, shape index: {}]
  %s3 = inlined_call_operand.hbm [shape: f32[16,32], index: 3, kind: output, shape index: {}]
  %s4 = sld [smem:[#allocation0]]
  $region45: #{_prenorm_impl.1} parent=0
    _
  %s6 = ssub.s32 1, %s4
  %s7 = scalar_select 0, %s6, %s4
  $region1: #{_prenorm_impl.1} parent=0
    #allocation2 [shape = 'u8[8192]{0}', space=vmem, size = 0x2000, scoped, tag = 'output window, operand 0']
    #allocation3 [shape = 's32[2]{0}', space=sflag, size = 0x8, scoped, tag = 'scoped memory for _prenorm_impl.1']
    %8 = vsyncpa [#allocation3], 0
    %s9 = scalar_lea.sflag [#allocation3], 1
    %10 = vsyncpa %s9, 0
    loop: start=0, step=1, limit=4
    $region2: #{_prenorm_impl.1} parent=1 // loop_pre_header
      _
    $region3: #{_prenorm_impl.1} parent=1 // loop_header
      %s12 = sphi 0, %s16
      %p13 = scmp.ge.s32.totalorder %s12, 4
      %s22 = sphi 0, %s24
      %s25 = sphi 0, %s22
      %s26 = sphi 0, %s25
      %s42 = sphi 0, %s26
      %s46 = sphi 0, %s46
      %s48 = sphi 0, %s46
      %s49 = sphi 0, %s48
      %s63 = sphi 0, %s49
      %s67 = sphi 0, %s67
      %s69 = sphi 0, %s67
      %s70 = sphi 0, %s69
      %s84 = sphi 0, %s70
      %s90 = sphi 0, %s92
      %s93 = sphi 0, %s90
      %s94 = sphi 0, %s93
      %s110 = sphi 0, %s94
    $region4: #{_prenorm_impl.1} parent=1 // loop_header_branch
      %15 = sbr.rel (%p13) target = $region8
    $region5: #{_prenorm_impl.1} parent=1 // loop_body
      %s17 = ssub.s32 %s12, 1
      %s18 = ssub.s32 %s12, 2
      %s19 = sadd.s32 %s12, 1
      %s20 = ssub.s32 %s12, %s19
      %p21 = scmp.eq.s32.totalorder %s20, 0
      %s23 = sadd.s32 %s22, 1
      %s24 = scalar_select %p21, %s22, %s23
      %p27 = pneg %p21
      %p28 = scmp.eq.s32.totalorder %s12, 1
      %p29 = por %p27, %p28
      %p30 = scmp.ne.s32.totalorder %s22, %s25
      %p31 = scmp.eq.s32.totalorder %s12, 0
      %p32 = por %p30, %p31
      %p33 = scmp.ne.s32.totalorder %s22, %s25
      %p34 = scmp.eq.s32.totalorder %s17, 1
      %p35 = por %p33, %p34
      %p36 = scmp.ne.s32.totalorder %s25, %s26
      %p37 = scmp.eq.s32.totalorder %s17, 0
      %p38 = por %p36, %p37
      %p39 = scmp.ne.s32.totalorder %s25, %s26
      %p40 = scmp.eq.s32.totalorder %s18, 1
      %p41 = por %p39, %p40
      %p43 = scmp.ne.s32.totalorder %s26, %s42
      %p44 = scmp.eq.s32.totalorder %s18, 0
      %p45 = por %p43, %p44
      %s47 = sadd.s32 %s46, 1
      %p50 = scmp.eq.s32.totalorder %s12, 1
      %p51 = scmp.ne.s32.totalorder %s46, %s48
      %p52 = scmp.eq.s32.totalorder %s12, 0
      %p53 = por %p51, %p52
      %p54 = scmp.ne.s32.totalorder %s46, %s48
      %p55 = scmp.eq.s32.totalorder %s17, 1
      %p56 = por %p54, %p55
      %p57 = scmp.ne.s32.totalorder %s48, %s49
      %p58 = scmp.eq.s32.totalorder %s17, 0
      %p59 = por %p57, %p58
      %p60 = scmp.ne.s32.totalorder %s48, %s49
      %p61 = scmp.eq.s32.totalorder %s18, 1
      %p62 = por %p60, %p61
      %p64 = scmp.ne.s32.totalorder %s49, %s63
      %p65 = scmp.eq.s32.totalorder %s18, 0
      %p66 = por %p64, %p65
      %s68 = sadd.s32 %s67, 1
      %p71 = scmp.eq.s32.totalorder %s12, 1
      %p72 = scmp.ne.s32.totalorder %s67, %s69
      %p73 = scmp.eq.s32.totalorder %s12, 0
      %p74 = por %p72, %p73
      %p75 = scmp.ne.s32.totalorder %s67, %s69
      %p76 = scmp.eq.s32.totalorder %s17, 1
      %p77 = por %p75, %p76
      %p78 = scmp.ne.s32.totalorder %s69, %s70
      %p79 = scmp.eq.s32.totalorder %s17, 0
      %p80 = por %p78, %p79
      %p81 = scmp.ne.s32.totalorder %s69, %s70
      %p82 = scmp.eq.s32.totalorder %s18, 1
      %p83 = por %p81, %p82
      %p85 = scmp.ne.s32.totalorder %s70, %s84
      %p86 = scmp.eq.s32.totalorder %s18, 0
      %p87 = por %p85, %p86
      %s88 = ssub.s32 %s12, %s19
      %p89 = scmp.eq.s32.totalorder %s88, 0
      %s91 = sadd.s32 %s90, 1
      %s92 = scalar_select %p89, %s90, %s91
      %p95 = pneg %p89
      %p96 = scmp.eq.s32.totalorder %s12, 1
      %p97 = por %p95, %p96
      %p98 = scmp.ne.s32.totalorder %s90, %s93
      %p99 = scmp.eq.s32.totalorder %s12, 0
      %p100 = por %p98, %p99
      %p101 = scmp.ne.s32.totalorder %s90, %s93
      %p102 = scmp.eq.s32.totalorder %s17, 1
      %p103 = por %p101, %p102
      %p104 = scmp.ne.s32.totalorder %s93, %s94
      %p105 = scmp.eq.s32.totalorder %s17, 0
      %p106 = por %p104, %p105
      %p107 = scmp.ne.s32.totalorder %s93, %s94
      %p108 = scmp.eq.s32.totalorder %s18, 1
      %p109 = por %p107, %p108
      %p111 = scmp.ne.s32.totalorder %s94, %s110
      %p112 = scmp.eq.s32.totalorder %s18, 0
      %p113 = por %p111, %p112
      %p114 = scmp.le.s32.totalorder 1, %s12
      %p115 = scmp.lt.s32.totalorder %s12, 3
      %p116 = pnand %p114, %p115
      %p117 = pneg %p116
      // Predicated region
      $region9: #{_prenorm_impl.1} parent=5 // pred_check
        _
      $region10: #{_prenorm_impl.1} parent=5 // pred_check_branch
        %119 = sbr.rel (%p116) target = $region12
      $region11: #{_prenorm_impl.1} parent=5 // pred_region
        %s120 = ssub.s32 %s12, 1
        // Predicated region
        $region13: #{_prenorm_impl.1} parent=11 // pred_check
          %p121 = pneg %p59
        $region14: #{_prenorm_impl.1} parent=11 // pred_check_branch
          %123 = sbr.rel (%p121) target = $region16
        $region15: #{_prenorm_impl.1} parent=11 // pred_region
          _
        $region16: #{_prenorm_impl.1} parent=11 // pred_fallthru
          _
        // Predicated region
        $region17: #{_prenorm_impl.1} parent=11 // pred_check
          %p124 = pneg %p80
        $region18: #{_prenorm_impl.1} parent=11 // pred_check_branch
          %126 = sbr.rel (%p124) target = $region20
        $region19: #{_prenorm_impl.1} parent=11 // pred_region
          _
        $region20: #{_prenorm_impl.1} parent=11 // pred_fallthru
          _
      $region12: #{_prenorm_impl.1} parent=5 // pred_fallthru
        _
      %p127 = scmp.lt.s32.totalorder %s12, 2
      // Predicated region
      $region21: #{_prenorm_impl.1} parent=5 // pred_check
        %p128 = pneg %p127
      $region22: #{_prenorm_impl.1} parent=5 // pred_check_branch
        %130 = sbr.rel (%p128) target = $region24
      $region23: #{_prenorm_impl.1} parent=5 // pred_region
        // Predicated region
        $region25: #{_prenorm_impl.1} parent=23 // pred_check
          %p131 = pneg %p32
        $region26: #{_prenorm_impl.1} parent=23 // pred_check_branch
          %133 = sbr.rel (%p131) target = $region28
        $region27: #{_prenorm_impl.1} parent=23 // pred_region
          %p134 = scmp.lt.s32.totalorder %s12, 1
          %s135 = scalar_select %p134, %s12, 1
          %s136 = smul.addr %s135, 8
          %s137 = scalar_lea.vmem %s0, %s136
        $region28: #{_prenorm_impl.1} parent=23 // pred_fallthru
          _
      $region24: #{_prenorm_impl.1} parent=5 // pred_fallthru
        _
      %p138 = scmp.le.s32.totalorder 1, %s12
      %p139 = scmp.lt.s32.totalorder %s12, 3
      %p140 = pnand %p138, %p139
      %p141 = pneg %p140
      // Predicated region
      $region29: #{_prenorm_impl.1} parent=5 // pred_check
        _
      $region30: #{_prenorm_impl.1} parent=5 // pred_check_branch
        %143 = sbr.rel (%p140) target = $region32
      $region31: #{_prenorm_impl.1} parent=5 // pred_region
        %s144 = ssub.s32 %s12, 1
        %p145 = scmp.lt.s32.totalorder %s17, 1
        %s146 = scalar_select %p145, %s17, 1
        %s147 = smul.addr %s146, 8
        %s148 = scalar_lea.vmem %s0, %s147
        %p149 = pneg %p38
        %p150 = pneg %p35
        %p151 = pneg %p59
        %p152 = pneg %p56
        %p153 = pneg %p80
        %p154 = pneg %p77
        %p155 = pneg %p106
        %p156 = pneg %p103
        %s157 = sand.u32 %s93, 1
        %s158 = scalar_lea.sflag [#allocation3], %s157
        %s159 = sand.u32 %s93, 1
        %s160 = smul.addr %s159, 8
        %s161 = scalar_lea.vmem [#allocation2], %s160
        %p162 = scmp.lt.s32.totalorder %s17, 1
        %s163 = scalar_select %p162, %s17, 1
        %s164 = smul.addr %s163, 8
        %s165 = scalar_lea.vmem %s0, %s164
        %v166 = vld [vmem:[%s165] sm:$0xff]
        %v167 = vld [vmem:[%s1] sm:$0x1]
        %v168 = vld [vmem:[%s1 + $0x1] sm:$0x1]
        %v169 = vld [vmem:[%s1 + $0x2] sm:$0x1]
        %vm170 = vcmask 261120
        %v171 = vsel %vm170, %v166, 0.0
        %172 = vadd.xlane.f32.xlu0 %v171
        %v173 = vpop.xlane.xlu0 %172
        %v174 = vrcp.pop 32.0
        %v175 = vmul.f32 32.0, %v174
        %v176 = vsub.f32 1.0, %v175
        %v177 = vmul.f32 %v174, %v176
        %v178 = vadd.f32 %v174, %v177
        %vm179 = vweird.f32 %v174
        %v180 = vsel %vm179, %v174, %v178
        %v181 = vmul.f32 %v173, %v180
        %v182 = vsub.f32 %v166, %v181
        %v183 = vmul.f32 %v182, %v182
        %v184 = vsel %vm170, %v183, 0.0
        %185 = vadd.xlane.f32.xlu0 %v184
        %v186 = vpop.xlane.xlu0 %185
        %v187 = vmul.f32 %v186, %v180
        %v188 = vadd.f32 %v187, 1e-05
        %v189 = vrsqrt.pop %v188
        %v190 = vmul.f32 %v189, %v188
        %v191 = vmul.f32 %v190, %v189
        %v192 = vmul.f32 0.5, %v191
        %v193 = vsub.f32 1.5, %v192
        %v194 = vmul.f32 %v189, %v193
        %vm195 = vweird.f32 %v188
        %vm196 = vweird.f32 %v189
        %vm197 = vmor %vm195, %vm196
        %v198 = vsel %vm197, %v189, %v194
        %v199 = vmul.f32 %v182, %v198
        %v200 = vld [vmem:[%s2] sm:$0xff]
        %v201 = vld [vmem:[%s2 + $0x8] sm:$0xff]
        %v202 = vld [vmem:[%s2 + $0x10] sm:$0xff]
        %v203 = vld [vmem:[%s2 + $0x18] sm:$0xff]
        %v204 = vperm.slane %v167, 0
        %v206 = vsel %vm170, %v199, 0
        %208 = vmatpush.msra.mxu0 0.0
        %209 = vmatpush.msra.mxu0 0.0
        %210 = vmatpush.msra.mxu0 0.0
        %211 = vmatpush.msra.mxu0 0.0
        %212 = vmatpush.msra.mxu0 0.0
        %213 = vmatpush.msra.mxu0 0.0
        %214 = vmatpush.msra.mxu0 0.0
        %215 = vmatpush.msra.mxu0 0.0
        %216 = vmatpush.msra.mxu0 0.0
        %217 = vmatpush.msra.mxu0 0.0
        %218 = vmatpush.msra.mxu0 0.0
        %219 = vmatpush.msra.mxu0 0.0
        %220 = vmatpush.msra.mxu0 %v203
        %221 = vmatpush.msra.mxu0 %v202
        %222 = vmatpush.msra.mxu0 %v201
        %223 = vmatpush.msra.mxu0 %v200
        %224 = vmatmul.f32.gmra.mxu0 %v206
        %v225 = vpop.f32.mrf.mxu0
        %v226 = vadd.f32 %v204, %v225
        %227 = vdwg.mxu0
        %v228 = vsel %vm170, %v226, 0.0
        %229 = vadd.xlane.f32.xlu0 %v228
        %v230 = vpop.xlane.xlu0 %229
        %v231 = vmul.f32 %v230, %v180
        %v232 = vsub.f32 %v226, %v231
        %v233 = vmul.f32 %v232, %v232
        %v234 = vsel %vm170, %v233, 0.0
        %235 = vadd.xlane.f32.xlu0 %v234
        %v236 = vpop.xlane.xlu0 %235
        %v237 = vmul.f32 %v236, %v180
        %v238 = vadd.f32 %v237, 1e-05
        %v239 = vrsqrt.pop %v238
        %v240 = vmul.f32 %v239, %v238
        %v241 = vmul.f32 %v240, %v239
        %v242 = vmul.f32 0.5, %v241
        %v243 = vsub.f32 1.5, %v242
        %v244 = vmul.f32 %v239, %v243
        %vm245 = vweird.f32 %v238
        %vm246 = vweird.f32 %v239
        %vm247 = vmor %vm245, %vm246
        %v248 = vsel %vm247, %v239, %v244
        %v249 = vmul.f32 %v232, %v248
        %v250 = vperm.slane %v168, 0
        %v251 = vmul.f32 %v249, %v250
        %v252 = vperm.slane %v169, 0
        %v253 = vadd.f32 %v251, %v252
        %254 = vst.msk [vmem:[%s161] sm:$0xff] %vm170, %v253
        %s255 = sand.u32 %s93, 1
        %s256 = scalar_lea.sflag [#allocation3], %s255
        %s257 = sand.u32 %s93, 1
        %s258 = smul.addr %s257, 8
        %s259 = scalar_lea.vmem [#allocation2], %s258
        // Predicated region
        $region33: #{_prenorm_impl.1} parent=31 // pred_check
          %p260 = pneg %p103
        $region34: #{_prenorm_impl.1} parent=31 // pred_check_branch
          %262 = sbr.rel (%p260) target = $region36
        $region35: #{_prenorm_impl.1} parent=31 // pred_region
          %264 = vsyncadd %s256, 0
          %s265 = smul.addr %s17, 8
          %s266 = scalar_lea.hbm %s3, %s265
          %s268 = sshll.u32 %s259, 4
          %s269 = int_to_ptr.vmem [resolvable:$true] %s268
          %s270 = sshll.u32 %s266, 4
          %s271 = int_to_ptr.hbm [resolvable:$true] %s270
          %273 = dma.vmem_to_hbm [thread:$0]  %s269, 128, %s271, %s256
        $region36: #{_prenorm_impl.1} parent=31 // pred_fallthru
          _
      $region32: #{_prenorm_impl.1} parent=5 // pred_fallthru
        _
      %p274 = scmp.le.s32.totalorder 2, %s12
      // Predicated region
      $region37: #{_prenorm_impl.1} parent=5 // pred_check
        %p275 = pneg %p274
      $region38: #{_prenorm_impl.1} parent=5 // pred_check_branch
        %277 = sbr.rel (%p275) target = $region40
      $region39: #{_prenorm_impl.1} parent=5 // pred_region
        %s278 = ssub.s32 %s12, 2
        // Predicated region
        $region41: #{_prenorm_impl.1} parent=39 // pred_check
          %p279 = pneg %p109
        $region42: #{_prenorm_impl.1} parent=39 // pred_check_branch
          %281 = sbr.rel (%p279) target = $region44
        $region43: #{_prenorm_impl.1} parent=39 // pred_region
          %s282 = sand.u32 %s94, 1
          %s283 = scalar_lea.sflag [#allocation3], %s282
          %s284 = sand.u32 %s94, 1
          %s285 = smul.addr %s284, 8
          %s286 = scalar_lea.vmem [#allocation2], %s285
          %288 = dma.done %s283, 128
        $region44: #{_prenorm_impl.1} parent=39 // pred_fallthru
          _
      $region40: #{_prenorm_impl.1} parent=5 // pred_fallthru
        _
    $region6: #{_prenorm_impl.1} parent=1 // loop_footer
      %s16 = sadd.s32 1, %s12
    $region7: #{_prenorm_impl.1} parent=1 // loop_footer_branch
      %11 = sbr.rel target = $region3
    $region8: #{_prenorm_impl.1} parent=1 // loop_exit
      _
    %289 = vsyncpa [#allocation3], 1
    %s290 = scalar_lea.sflag [#allocation3], 1
    %291 = vsyncpa %s290, 1

// kernel: _prenorm_impl.1
$region0: #{_prenorm_impl.1}
  #allocation0 [shape = 'u32[]', space=smem, size = 0x4, offset = 0x4, fixed_abs, tag = 'smem constant byte address 0x4 - core index']
  #allocation1 [shape = 'u32[72,128]{1,0:T(1,128)}', space=vmem, size = 0x9000, scoped, tag = 'internal scratch']
  %s0 = inlined_call_operand.vmem [shape: f32[16,32], index: 0, kind: input, shape index: {}]
  %s1 = inlined_call_operand.vmem [shape: f32[8,32], index: 1, kind: input, shape index: {}]
  %s2 = inlined_call_operand.vmem [shape: f32[32,32], index: 2, kind: input, shape index: {}]
  %s3 = inlined_call_operand.hbm [shape: f32[16,32], index: 3, kind: output, shape index: {}]
  %s4 = sld [smem:[#allocation0]]
  $region45: #{_prenorm_impl.1} parent=0
    _
  %s6 = ssub.s32 1, %s4
  %s7 = scalar_select 0, %s6, %s4
  $region1: #{_prenorm_impl.1} parent=0
    #allocation2 [shape = 'u8[8192]{0}', space=vmem, size = 0x2000, scoped, tag = 'output window, operand 0']
    #allocation3 [shape = 's32[2]{0}', space=sflag, size = 0x8, scoped, tag = 'scoped memory for _prenorm_impl.1']
    %8 = vsyncpa [#allocation3], 0
    %s9 = scalar_lea.sflag [#allocation3], 1
    %10 = vsyncpa %s9, 0
    loop: start=0, step=1, limit=4
    $region2: #{_prenorm_impl.1} parent=1 // loop_pre_header
      _
    $region3: #{_prenorm_impl.1} parent=1 // loop_header
      %s12 = sphi 0, %s16
      %p13 = scmp.ge.s32.totalorder %s12, 4
      %s22 = sphi 0, %s24
      %s25 = sphi 0, %s22
      %s26 = sphi 0, %s25
      %s42 = sphi 0, %s26
      %s46 = sphi 0, %s46
      %s48 = sphi 0, %s46
      %s49 = sphi 0, %s48
      %s63 = sphi 0, %s49
      %s67 = sphi 0, %s67
      %s69 = sphi 0, %s67
      %s70 = sphi 0, %s69
      %s84 = sphi 0, %s70
      %s90 = sphi 0, %s92
      %s93 = sphi 0, %s90
      %s94 = sphi 0, %s93
      %s110 = sphi 0, %s94
    $region4: #{_prenorm_impl.1} parent=1 // loop_header_branch
      %15 = sbr.rel (%p13) target = $region8
    $region5: #{_prenorm_impl.1} parent=1 // loop_body
      %s17 = ssub.s32 %s12, 1
      %s18 = ssub.s32 %s12, 2
      %s19 = sadd.s32 %s12, 1
      %s20 = ssub.s32 %s12, %s19
      %p21 = scmp.eq.s32.totalorder %s20, 0
      %s23 = sadd.s32 %s22, 1
      %s24 = scalar_select %p21, %s22, %s23
      %p27 = pneg %p21
      %p28 = scmp.eq.s32.totalorder %s12, 1
      %p29 = por %p27, %p28
      %p30 = scmp.ne.s32.totalorder %s22, %s25
      %p31 = scmp.eq.s32.totalorder %s12, 0
      %p32 = por %p30, %p31
      %p33 = scmp.ne.s32.totalorder %s22, %s25
      %p34 = scmp.eq.s32.totalorder %s17, 1
      %p35 = por %p33, %p34
      %p36 = scmp.ne.s32.totalorder %s25, %s26
      %p37 = scmp.eq.s32.totalorder %s17, 0
      %p38 = por %p36, %p37
      %p39 = scmp.ne.s32.totalorder %s25, %s26
      %p40 = scmp.eq.s32.totalorder %s18, 1
      %p41 = por %p39, %p40
      %p43 = scmp.ne.s32.totalorder %s26, %s42
      %p44 = scmp.eq.s32.totalorder %s18, 0
      %p45 = por %p43, %p44
      %s47 = sadd.s32 %s46, 1
      %p50 = scmp.eq.s32.totalorder %s12, 1
      %p51 = scmp.ne.s32.totalorder %s46, %s48
      %p52 = scmp.eq.s32.totalorder %s12, 0
      %p53 = por %p51, %p52
      %p54 = scmp.ne.s32.totalorder %s46, %s48
      %p55 = scmp.eq.s32.totalorder %s17, 1
      %p56 = por %p54, %p55
      %p57 = scmp.ne.s32.totalorder %s48, %s49
      %p58 = scmp.eq.s32.totalorder %s17, 0
      %p59 = por %p57, %p58
      %p60 = scmp.ne.s32.totalorder %s48, %s49
      %p61 = scmp.eq.s32.totalorder %s18, 1
      %p62 = por %p60, %p61
      %p64 = scmp.ne.s32.totalorder %s49, %s63
      %p65 = scmp.eq.s32.totalorder %s18, 0
      %p66 = por %p64, %p65
      %s68 = sadd.s32 %s67, 1
      %p71 = scmp.eq.s32.totalorder %s12, 1
      %p72 = scmp.ne.s32.totalorder %s67, %s69
      %p73 = scmp.eq.s32.totalorder %s12, 0
      %p74 = por %p72, %p73
      %p75 = scmp.ne.s32.totalorder %s67, %s69
      %p76 = scmp.eq.s32.totalorder %s17, 1
      %p77 = por %p75, %p76
      %p78 = scmp.ne.s32.totalorder %s69, %s70
      %p79 = scmp.eq.s32.totalorder %s17, 0
      %p80 = por %p78, %p79
      %p81 = scmp.ne.s32.totalorder %s69, %s70
      %p82 = scmp.eq.s32.totalorder %s18, 1
      %p83 = por %p81, %p82
      %p85 = scmp.ne.s32.totalorder %s70, %s84
      %p86 = scmp.eq.s32.totalorder %s18, 0
      %p87 = por %p85, %p86
      %s88 = ssub.s32 %s12, %s19
      %p89 = scmp.eq.s32.totalorder %s88, 0
      %s91 = sadd.s32 %s90, 1
      %s92 = scalar_select %p89, %s90, %s91
      %p95 = pneg %p89
      %p96 = scmp.eq.s32.totalorder %s12, 1
      %p97 = por %p95, %p96
      %p98 = scmp.ne.s32.totalorder %s90, %s93
      %p99 = scmp.eq.s32.totalorder %s12, 0
      %p100 = por %p98, %p99
      %p101 = scmp.ne.s32.totalorder %s90, %s93
      %p102 = scmp.eq.s32.totalorder %s17, 1
      %p103 = por %p101, %p102
      %p104 = scmp.ne.s32.totalorder %s93, %s94
      %p105 = scmp.eq.s32.totalorder %s17, 0
      %p106 = por %p104, %p105
      %p107 = scmp.ne.s32.totalorder %s93, %s94
      %p108 = scmp.eq.s32.totalorder %s18, 1
      %p109 = por %p107, %p108
      %p111 = scmp.ne.s32.totalorder %s94, %s110
      %p112 = scmp.eq.s32.totalorder %s18, 0
      %p113 = por %p111, %p112
      %p114 = scmp.le.s32.totalorder 1, %s12
      %p115 = scmp.lt.s32.totalorder %s12, 3
      %p116 = pnand %p114, %p115
      %p117 = pneg %p116
      // Predicated region
      $region9: #{_prenorm_impl.1} parent=5 // pred_check
        _
      $region10: #{_prenorm_impl.1} parent=5 // pred_check_branch
        %119 = sbr.rel (%p116) target = $region12
      $region11: #{_prenorm_impl.1} parent=5 // pred_region
        %s120 = ssub.s32 %s12, 1
        // Predicated region
        $region13: #{_prenorm_impl.1} parent=11 // pred_check
          %p121 = pneg %p59
        $region14: #{_prenorm_impl.1} parent=11 // pred_check_branch
          %123 = sbr.rel (%p121) target = $region16
        $region15: #{_prenorm_impl.1} parent=11 // pred_region
          _
        $region16: #{_prenorm_impl.1} parent=11 // pred_fallthru
          _
        // Predicated region
        $region17: #{_prenorm_impl.1} parent=11 // pred_check
          %p124 = pneg %p80
        $region18: #{_prenorm_impl.1} parent=11 // pred_check_branch
          %126 = sbr.rel (%p124) target = $region20
        $region19: #{_prenorm_impl.1} parent=11 // pred_region
          _
        $region20: #{_prenorm_impl.1} parent=11 // pred_fallthru
          _
      $region12: #{_prenorm_impl.1} parent=5 // pred_fallthru
        _
      %p127 = scmp.lt.s32.totalorder %s12, 2
      // Predicated region
      $region21: #{_prenorm_impl.1} parent=5 // pred_check
        %p128 = pneg %p127
      $region22: #{_prenorm_impl.1} parent=5 // pred_check_branch
        %130 = sbr.rel (%p128) target = $region24
      $region23: #{_prenorm_impl.1} parent=5 // pred_region
        // Predicated region
        $region25: #{_prenorm_impl.1} parent=23 // pred_check
          %p131 = pneg %p32
        $region26: #{_prenorm_impl.1} parent=23 // pred_check_branch
          %133 = sbr.rel (%p131) target = $region28
        $region27: #{_prenorm_impl.1} parent=23 // pred_region
          %p134 = scmp.lt.s32.totalorder %s12, 1
          %s135 = scalar_select %p134, %s12, 1
          %s136 = smul.addr %s135, 8
          %s137 = scalar_lea.vmem %s0, %s136
        $region28: #{_prenorm_impl.1} parent=23 // pred_fallthru
          _
      $region24: #{_prenorm_impl.1} parent=5 // pred_fallthru
        _
      %p138 = scmp.le.s32.totalorder 1, %s12
      %p139 = scmp.lt.s32.totalorder %s12, 3
      %p140 = pnand %p138, %p139
      %p141 = pneg %p140
      // Predicated region
      $region29: #{_prenorm_impl.1} parent=5 // pred_check
        _
      $region30: #{_prenorm_impl.1} parent=5 // pred_check_branch
        %143 = sbr.rel (%p140) target = $region32
      $region31: #{_prenorm_impl.1} parent=5 // pred_region
        %s144 = ssub.s32 %s12, 1
        %p145 = scmp.lt.s32.totalorder %s17, 1
        %s146 = scalar_select %p145, %s17, 1
        %s147 = smul.addr %s146, 8
        %s148 = scalar_lea.vmem %s0, %s147
        %p149 = pneg %p38
        %p150 = pneg %p35
        %p151 = pneg %p59
        %p152 = pneg %p56
        %p153 = pneg %p80
        %p154 = pneg %p77
        %p155 = pneg %p106
        %p156 = pneg %p103
        %s157 = sand.u32 %s93, 1
        %s158 = scalar_lea.sflag [#allocation3], %s157
        %s159 = sand.u32 %s93, 1
        %s160 = smul.addr %s159, 8
        %s161 = scalar_lea.vmem [#allocation2], %s160
        %p162 = scmp.lt.s32.totalorder %s17, 1
        %s163 = scalar_select %p162, %s17, 1
        %s164 = smul.addr %s163, 8
        %s165 = scalar_lea.vmem %s0, %s164
        %v166 = vld [vmem:[%s165] sm:$0xff]
        %v167 = vld [vmem:[%s1] sm:$0x1]
        %v168 = vld [vmem:[%s1 + $0x1] sm:$0x1]
        %v169 = vld [vmem:[%s1 + $0x2] sm:$0x1]
        %vm170 = vcmask 261120
        %v171 = vsel %vm170, %v166, 0.0
        %172 = vadd.xlane.f32.xlu0 %v171
        %v173 = vpop.xlane.xlu0 %172
        %v174 = vrcp.pop 32.0
        %v175 = vmul.f32 32.0, %v174
        %v176 = vsub.f32 1.0, %v175
        %v177 = vmul.f32 %v174, %v176
        %v178 = vadd.f32 %v174, %v177
        %vm179 = vweird.f32 %v174
        %v180 = vsel %vm179, %v174, %v178
        %v181 = vmul.f32 %v173, %v180
        %v182 = vsub.f32 %v166, %v181
        %v183 = vmul.f32 %v182, %v182
        %v184 = vsel %vm170, %v183, 0.0
        %185 = vadd.xlane.f32.xlu0 %v184
        %v186 = vpop.xlane.xlu0 %185
        %v187 = vmul.f32 %v186, %v180
        %v188 = vadd.f32 %v187, 1e-05
        %v189 = vrsqrt.pop %v188
        %v190 = vmul.f32 %v189, %v188
        %v191 = vmul.f32 %v190, %v189
        %v192 = vmul.f32 0.5, %v191
        %v193 = vsub.f32 1.5, %v192
        %v194 = vmul.f32 %v189, %v193
        %vm195 = vweird.f32 %v188
        %vm196 = vweird.f32 %v189
        %vm197 = vmor %vm195, %vm196
        %v198 = vsel %vm197, %v189, %v194
        %v199 = vmul.f32 %v182, %v198
        %v200 = vld [vmem:[%s2] sm:$0xff]
        %v201 = vld [vmem:[%s2 + $0x8] sm:$0xff]
        %v202 = vld [vmem:[%s2 + $0x10] sm:$0xff]
        %v203 = vld [vmem:[%s2 + $0x18] sm:$0xff]
        %v204 = vperm.slane %v167, 0
        %v206 = vsel %vm170, %v199, 0
        %208 = vmatpush.msra.mxu0 0.0
        %209 = vmatpush.msra.mxu0 0.0
        %210 = vmatpush.msra.mxu0 0.0
        %211 = vmatpush.msra.mxu0 0.0
        %212 = vmatpush.msra.mxu0 0.0
        %213 = vmatpush.msra.mxu0 0.0
        %214 = vmatpush.msra.mxu0 0.0
        %215 = vmatpush.msra.mxu0 0.0
        %216 = vmatpush.msra.mxu0 0.0
        %217 = vmatpush.msra.mxu0 0.0
        %218 = vmatpush.msra.mxu0 0.0
        %219 = vmatpush.msra.mxu0 0.0
        %220 = vmatpush.msra.mxu0 %v203
        %221 = vmatpush.msra.mxu0 %v202
        %222 = vmatpush.msra.mxu0 %v201
        %223 = vmatpush.msra.mxu0 %v200
        %224 = vmatmul.f32.gmra.mxu0 %v206
        %v225 = vpop.f32.mrf.mxu0
        %v226 = vadd.f32 %v204, %v225
        %227 = vdwg.mxu0
        %v228 = vsel %vm170, %v226, 0.0
        %229 = vadd.xlane.f32.xlu0 %v228
        %v230 = vpop.xlane.xlu0 %229
        %v231 = vmul.f32 %v230, %v180
        %v232 = vsub.f32 %v226, %v231
        %v233 = vmul.f32 %v232, %v232
        %v234 = vsel %vm170, %v233, 0.0
        %235 = vadd.xlane.f32.xlu0 %v234
        %v236 = vpop.xlane.xlu0 %235
        %v237 = vmul.f32 %v236, %v180
        %v238 = vadd.f32 %v237, 1e-05
        %v239 = vrsqrt.pop %v238
        %v240 = vmul.f32 %v239, %v238
        %v241 = vmul.f32 %v240, %v239
        %v242 = vmul.f32 0.5, %v241
        %v243 = vsub.f32 1.5, %v242
        %v244 = vmul.f32 %v239, %v243
        %vm245 = vweird.f32 %v238
        %vm246 = vweird.f32 %v239
        %vm247 = vmor %vm245, %vm246
        %v248 = vsel %vm247, %v239, %v244
        %v249 = vmul.f32 %v232, %v248
        %v250 = vperm.slane %v168, 0
        %v251 = vmul.f32 %v249, %v250
        %v252 = vperm.slane %v169, 0
        %v253 = vadd.f32 %v251, %v252
        %254 = vst.msk [vmem:[%s161] sm:$0xff] %vm170, %v253
        %s255 = sand.u32 %s93, 1
        %s256 = scalar_lea.sflag [#allocation3], %s255
        %s257 = sand.u32 %s93, 1
        %s258 = smul.addr %s257, 8
        %s259 = scalar_lea.vmem [#allocation2], %s258
        // Predicated region
        $region33: #{_prenorm_impl.1} parent=31 // pred_check
          %p260 = pneg %p103
        $region34: #{_prenorm_impl.1} parent=31 // pred_check_branch
          %262 = sbr.rel (%p260) target = $region36
        $region35: #{_prenorm_impl.1} parent=31 // pred_region
          %264 = vsyncadd %s256, 0
          %s265 = smul.addr %s17, 8
          %s266 = scalar_lea.hbm %s3, %s265
          %s268 = sshll.u32 %s259, 4
          %s269 = int_to_ptr.vmem [resolvable:$true] %s268
          %s270 = sshll.u32 %s266, 4
          %s271 = int_to_ptr.hbm [resolvable:$true] %s270
          %273 = dma.vmem_to_hbm [thread:$0]  %s269, 128, %s271, %s256
        $region36: #{_prenorm_impl.1} parent=31 // pred_fallthru
          _
      $region32: #{_prenorm_impl.1} parent=5 // pred_fallthru
        _
      %p274 = scmp.le.s32.totalorder 2, %s12
      // Predicated region
      $region37: #{_prenorm_impl.1} parent=5 // pred_check
        %p275 = pneg %p274
      $region38: #{_prenorm_impl.1} parent=5 // pred_check_branch
        %277 = sbr.rel (%p275) target = $region40
      $region39: #{_prenorm_impl.1} parent=5 // pred_region
        %s278 = ssub.s32 %s12, 2
        // Predicated region
        $region41: #{_prenorm_impl.1} parent=39 // pred_check
          %p279 = pneg %p109
        $region42: #{_prenorm_impl.1} parent=39 // pred_check_branch
          %281 = sbr.rel (%p279) target = $region44
        $region43: #{_prenorm_impl.1} parent=39 // pred_region
          %s282 = sand.u32 %s94, 1
          %s283 = scalar_lea.sflag [#allocation3], %s282
          %s284 = sand.u32 %s94, 1
          %s285 = smul.addr %s284, 8
          %s286 = scalar_lea.vmem [#allocation2], %s285
          %288 = dma.done %s283, 128
        $region44: #{_prenorm_impl.1} parent=39 // pred_fallthru
          _
      $region40: #{_prenorm_impl.1} parent=5 // pred_fallthru
        _
    $region6: #{_prenorm_impl.1} parent=1 // loop_footer
      %s16 = sadd.s32 1, %s12
    $region7: #{_prenorm_impl.1} parent=1 // loop_footer_branch
      %11 = sbr.rel target = $region3
    $region8: #{_prenorm_impl.1} parent=1 // loop_exit
      _
    %289 = vsyncpa [#allocation3], 1
    %s290 = scalar_lea.sflag [#allocation3], 1
    %291 = vsyncpa %s290, 1

</llo_original>
